<compile_context>
chip_gen: v6e
topology: v6e:2x2x1
jax: 0.10.0
libtpu: 0.0.40
codegen_flags: <defaults>
</compile_context>

<pallas_src>
import functools
import math

import numpy as np

import jax
import jax.numpy as jnp
from jax.experimental import pallas as pl
from jax.experimental.pallas import tpu as pltpu


_STRIP_ROWS = 128  # packed rows per inner-loop strip (keeps intermediates in vregs)


def _rbf_kernel(x_ref, e_ref, c_ref, o_ref, *, strip_rows):
    # x_ref: (TR, P)   packed x, P consecutive values per row
    # e_ref: (P, W)    expansion matrix, E[j, j*C + k] = sqrt(gamma)
    # c_ref: (1, W)    sqrt(gamma) * centers, tiled P times
    # o_ref: (TR, W)   o[r, j*C + k] = exp(-gamma * (x[P*r + j] - centers[k])^2)
    e = e_ref[...]                      # hoisted: 1 vreg, reused every strip
    c = c_ref[...]                      # hoisted: 1 vreg, sublane-broadcast below
    n_strips = x_ref.shape[0] // strip_rows

    def strip(s, carry):
        row = pl.multiple_of(s * strip_rows, strip_rows)
        xs = x_ref[pl.ds(row, strip_rows), :]                     # (SR, P)
        # Lane expansion + sqrt(gamma) scaling on the (otherwise idle) MXU.
        xe = jnp.dot(xs, e, preferred_element_type=jnp.float32)   # (SR, W)
        d = xe - c                                                # sublane bcast
        o_ref[pl.ds(row, strip_rows), :] = jnp.exp(-(d * d))      # EUP + vst
        return carry

    jax.lax.fori_loop(0, n_strips, strip, None, unroll=2)


def rbf_forward(x, centers, gamma, *, target_block_bytes=4 * 1024 * 1024):
    """exp(-gamma * (reshape(x, (-1, 1)) - centers)^2) -> (N, n_centers)."""
    x_flat = jnp.ravel(x).astype(jnp.float32)
    n = x_flat.shape[0]

    centers_np = np.asarray(centers, dtype=np.float32).reshape(-1)
    n_centers = int(centers_np.shape[0])
    # gamma / centers are static module parameters (folded into constants).
    sqrt_gamma = math.sqrt(float(gamma))

    if n == 0:
        return jnp.zeros((0, n_centers), jnp.float32)

    # Packing factor p: p*C is a multiple of 128 lanes, and (r, j*C+k)
    # row-major is byte-identical to (p*r + j, k) row-major (free reshape).
    p = 128 // math.gcd(128, n_centers)
    w = p * n_centers

    # Constant operands: expansion matrix (MXU) and scaled centers row.
    expand = np.zeros((p, w), np.float32)
    for j in range(p):
        expand[j, j * n_centers:(j + 1) * n_centers] = sqrt_gamma
    c_tiled = np.tile(sqrt_gamma * centers_np, p).reshape(1, w)

    # ---- tiling -------------------------------------------------------------
    sr = _STRIP_ROWS
    r = pl.cdiv(n, p)                               # packed rows
    bytes_per_row = w * 4
    r_rounded = pl.cdiv(r, sr) * sr
    tr = max(sr, (target_block_bytes // bytes_per_row) // sr * sr)
    tr = min(tr, r_rounded)                         # multiple of sr
    num_tiles = pl.cdiv(r, tr)
    if num_tiles > 1:
        # v7x megacore: keep an even number of "parallel" grid steps.
        if num_tiles % 2:
            num_tiles += 1
        tr = pl.cdiv(pl.cdiv(r, num_tiles), sr) * sr
        num_tiles = pl.cdiv(r, tr)
    elif r >= 2 * sr and r * bytes_per_row >= (1 << 20):
        # Medium single-tile case: still split across the two TensorCores.
        tr = pl.cdiv(pl.cdiv(r, 2), sr) * sr
        num_tiles = pl.cdiv(r, tr)
    r_pad = num_tiles * tr
    n_pad = r_pad * p

    if n_pad != n:                                  # ragged tail: pad, slice later
        x_flat = jnp.pad(x_flat, (0, n_pad - n))
    x_packed = x_flat.reshape(r_pad, p)             # free reshape

    kernel = functools.partial(_rbf_kernel, strip_rows=sr)

    out_packed = pl.pallas_call(
        kernel,
        out_shape=jax.ShapeDtypeStruct((r_pad, w), jnp.float32),
        grid_spec=pltpu.PrefetchScalarGridSpec(
            num_scalar_prefetch=0,
            grid=(num_tiles,),
            in_specs=[
                pl.BlockSpec((tr, p), lambda i: (i, 0)),   # x tile
                pl.BlockSpec((p, w), lambda i: (0, 0)),    # expansion (fetched once)
                pl.BlockSpec((1, w), lambda i: (0, 0)),    # scaled centers (fetched once)
            ],
            out_specs=pl.BlockSpec((tr, w), lambda i: (i, 0)),
        ),
        compiler_params=pltpu.CompilerParams(
            dimension_semantics=("parallel",),
            # ~16 MiB peak (lane-padded x tile + output tile, double-buffered);
            # 48 MiB clears v5e's 16 MiB scoped default and fits v7x's 64 MiB.
            vmem_limit_bytes=48 * 1024 * 1024,
        ),
    )(x_packed, jnp.asarray(expand), jnp.asarray(c_tiled))

    # (r_pad, W) row-major is byte-identical to (n_pad, C): free reshape.
    out = out_packed.reshape(n_pad, n_centers)
    if n_pad != n:
        out = out[:n]
    return out


if __name__ == "__main__":
    key = jax.random.PRNGKey(0)

    # Deterministic "module parameters" (shapes from __init__):
    n_centers = 16
    centers = jnp.linspace(0.0, 30.0, n_centers, dtype=jnp.float32)
    gamma = 10.0

    # Example input: any shape is allowed; forward flattens it to (-1, 1).
    x = jax.random.normal(key, (2, 4, 16, 16), dtype=jnp.float32) * 5.0

    y = rbf_forward(x, centers, gamma)
    y = jax.block_until_ready(y)

    # Reference check (pure JAX, same formula as the PyTorch module).
    x_col = jnp.reshape(x, (-1, 1))
    ref = jnp.exp(-gamma * jnp.square(x_col - jnp.reshape(centers, (1, -1))))
    assert y.shape == (2 * 4 * 16 * 16, n_centers)
    err = jnp.max(jnp.abs(y - ref))
    assert jnp.allclose(y, ref, atol=2e-5, rtol=2e-5), float(err)

    print("KERNEL_OK")
</pallas_src>

<mosaic_0001>
module attributes {stable_mosaic.version = 11 : i64} {
  func.func @_rbf_kernel(%arg0: i32, %arg1: memref<256x8xf32, #tpu.memory_space<vmem>>, %arg2: memref<8x128xf32, #tpu.memory_space<vmem>>, %arg3: memref<1x128xf32, #tpu.memory_space<vmem>>, %arg4: memref<256x128xf32, #tpu.memory_space<vmem>>) attributes {dimension_semantics = [#tpu.dimension_semantics<parallel>], iteration_bounds = array<i64: 1>, scalar_prefetch = 0 : i64, scratch_operands = 0 : i64, tpu.core_type = #tpu.core_type<tc>, window_params = [{transform_indices = @transform_0, window_bounds = array<i64: 256, 8>}, {pipeline_mode = #tpu.pipeline_mode<synchronous>, transform_indices = @transform_1, window_bounds = array<i64: 8, 128>}, {pipeline_mode = #tpu.pipeline_mode<synchronous>, transform_indices = @transform_2, window_bounds = array<i64: 1, 128>}, {transform_indices = @transform_3, window_bounds = array<i64: 256, 128>}]} {
    %c0 = arith.constant 0 : index
    %c0_0 = arith.constant 0 : index
    %0 = vector.load %arg2[%c0, %c0_0] : memref<8x128xf32, #tpu.memory_space<vmem>>, vector<8x128xf32>
    %c0_1 = arith.constant 0 : index
    %c0_2 = arith.constant 0 : index
    %1 = vector.load %arg3[%c0_1, %c0_2] : memref<1x128xf32, #tpu.memory_space<vmem>>, vector<1x128xf32>
    %c0_i32 = arith.constant 0 : i32
    %c128_i32 = arith.constant 128 : i32
    %2 = arith.muli %c0_i32, %c128_i32 : i32
    %3 = tpu.assume_multiple %2, 128 : i32
    %4 = arith.index_cast %3 : i32 to index
    %c0_3 = arith.constant 0 : index
    %5 = vector.load %arg1[%4, %c0_3] : memref<256x8xf32, #tpu.memory_space<vmem>>, vector<128x8xf32>
    %cst = arith.constant dense<0.000000e+00> : vector<128x128xf32>
    %6 = tpu.matmul %5, %0, %cst {dimension_numbers = #tpu.dot_dimension_numbers<[1], [0], [0], [1], [0, 0, 1, 1], [], []>} : vector<128x8xf32>, vector<8x128xf32>, vector<128x128xf32> -> vector<128x128xf32>
    %7 = vector.broadcast %1 : vector<1x128xf32> to vector<128x128xf32>
    %8 = arith.subf %6, %7 : vector<128x128xf32>
    %9 = arith.mulf %8, %8 : vector<128x128xf32>
    %cst_4 = arith.constant 0.000000e+00 : f32
    %10 = vector.broadcast %cst_4 : f32 to vector<128x128xf32>
    %11 = arith.subf %10, %9 : vector<128x128xf32>
    %12 = math.exp %11 : vector<128x128xf32>
    %13 = arith.index_cast %3 : i32 to index
    %c0_5 = arith.constant 0 : index
    %14 = vector.load %arg4[%13, %c0_5] : memref<256x128xf32, #tpu.memory_space<vmem>>, vector<128x128xf32>
    tpu.vector_store %arg4[%13, %c0_5], %12 {strides = array<i32>} : memref<256x128xf32, #tpu.memory_space<vmem>>, vector<128x128xf32>,
    %c1_i32 = arith.constant 1 : i32
    %c128_i32_6 = arith.constant 128 : i32
    %15 = arith.muli %c1_i32, %c128_i32_6 : i32
    %16 = tpu.assume_multiple %15, 128 : i32
    %17 = arith.index_cast %16 : i32 to index
    %c0_7 = arith.constant 0 : index
    %18 = vector.load %arg1[%17, %c0_7] : memref<256x8xf32, #tpu.memory_space<vmem>>, vector<128x8xf32>
    %cst_8 = arith.constant dense<0.000000e+00> : vector<128x128xf32>
    %19 = tpu.matmul %18, %0, %cst_8 {dimension_numbers = #tpu.dot_dimension_numbers<[1], [0], [0], [1], [0, 0, 1, 1], [], []>} : vector<128x8xf32>, vector<8x128xf32>, vector<128x128xf32> -> vector<128x128xf32>
    %20 = vector.broadcast %1 : vector<1x128xf32> to vector<128x128xf32>
    %21 = arith.subf %19, %20 : vector<128x128xf32>
    %22 = arith.mulf %21, %21 : vector<128x128xf32>
    %cst_9 = arith.constant 0.000000e+00 : f32
    %23 = vector.broadcast %cst_9 : f32 to vector<128x128xf32>
    %24 = arith.subf %23, %22 : vector<128x128xf32>
    %25 = math.exp %24 : vector<128x128xf32>
    %26 = arith.index_cast %16 : i32 to index
    %c0_10 = arith.constant 0 : index
    %27 = vector.load %arg4[%26, %c0_10] : memref<256x128xf32, #tpu.memory_space<vmem>>, vector<128x128xf32>
    tpu.vector_store %arg4[%26, %c0_10], %25 {strides = array<i32>} : memref<256x128xf32, #tpu.memory_space<vmem>>, vector<128x128xf32>,
    %c2_i32 = arith.constant 2 : i32
    return
  }
  func.func @transform_0(%arg0: i32) -> (i32, i32) {
    %c0_i32 = arith.constant 0 : i32
    %c0_i32_0 = arith.constant 0 : i32
    return %arg0, %c0_i32 : i32, i32
  }
  func.func @transform_1(%arg0: i32) -> (i32, i32) {
    %c0_i32 = arith.constant 0 : i32
    %c0_i32_0 = arith.constant 0 : i32
    %c0_i32_1 = arith.constant 0 : i32
    return %c0_i32, %c0_i32_0 : i32, i32
  }
  func.func @transform_2(%arg0: i32) -> (i32, i32) {
    %c0_i32 = arith.constant 0 : i32
    %c0_i32_0 = arith.constant 0 : i32
    %c0_i32_1 = arith.constant 0 : i32
    return %c0_i32, %c0_i32_0 : i32, i32
  }
  func.func @transform_3(%arg0: i32) -> (i32, i32) {
    %c0_i32 = arith.constant 0 : i32
    %c0_i32_0 = arith.constant 0 : i32
    return %arg0, %c0_i32 : i32, i32
  }
}

</mosaic_0001>

<llo_original>
// kernel: tpu_custom_call.1
$region0: #{tpu_custom_call.1}
  #allocation0 [shape = 'u32[]', space=smem, size = 0x4, offset = 0x4, fixed_abs, tag = 'smem constant byte address 0x4 - core index']
  #allocation1 [shape = 'u32[144,128]{1,0:T(1,128)}', space=vmem, size = 0x12000, scoped, tag = 'internal scratch']
  %s0 = inlined_call_operand.vmem [shape: f32[256,8], index: 0, kind: input, shape index: {}]
  %s1 = inlined_call_operand.vmem [shape: f32[8,128], index: 1, kind: input, shape index: {}]
  %s2 = inlined_call_operand.vmem [shape: f32[1,128], index: 2, kind: input, shape index: {}]
  %s3 = inlined_call_operand.hbm [shape: f32[256,128], index: 3, kind: output, shape index: {}]
  %s4 = sld [smem:[#allocation0]]
  $region22: #{tpu_custom_call.1} parent=0
    _
  %s6 = ssub.s32 1, %s4
  %s7 = scalar_select 0, %s6, %s4
  $region1: #{tpu_custom_call.1} parent=0
    #allocation2 [shape = 'u8[131072]{0}', space=vmem, size = 0x20000, scoped, tag = 'output window, operand 0, single buffered']
    #allocation3 [shape = 's32[1]{0}', space=sflag, size = 0x4, scoped, tag = 'scoped memory for tpu_custom_call.1']
    %8 = vsyncpa [#allocation3], 0
    // Predicated region
    $region2: #{tpu_custom_call.1} parent=1 // pred_check
      _
    $region3: #{tpu_custom_call.1} parent=1 // pred_check_branch
      %10 = sbr.rel (0) target = $region5
    $region4: #{tpu_custom_call.1} parent=1 // pred_region
      _
    $region5: #{tpu_custom_call.1} parent=1 // pred_fallthru
      _
    // Predicated region
    $region6: #{tpu_custom_call.1} parent=1 // pred_check
      _
    $region7: #{tpu_custom_call.1} parent=1 // pred_check_branch
      %12 = sbr.rel (0) target = $region9
    $region8: #{tpu_custom_call.1} parent=1 // pred_region
      _
    $region9: #{tpu_custom_call.1} parent=1 // pred_fallthru
      _
    // Predicated region
    $region10: #{tpu_custom_call.1} parent=1 // pred_check
      _
    $region11: #{tpu_custom_call.1} parent=1 // pred_check_branch
      %14 = sbr.rel (0) target = $region13
    $region12: #{tpu_custom_call.1} parent=1 // pred_region
      _
    $region13: #{tpu_custom_call.1} parent=1 // pred_fallthru
      _
    %v15 = vld [vmem:[%s1] sm:$0xff]
    %v16 = vld [vmem:[%s2] sm:$0x1]
    %v17 = vld [vmem:[%s0] sm:$0xff]
    %v18 = vld [vmem:[%s0 + $0x8] sm:$0xff]
    %v19 = vld [vmem:[%s0 + $0x10] sm:$0xff]
    %v20 = vld [vmem:[%s0 + $0x18] sm:$0xff]
    %v21 = vld [vmem:[%s0 + $0x20] sm:$0xff]
    %v22 = vld [vmem:[%s0 + $0x28] sm:$0xff]
    %v23 = vld [vmem:[%s0 + $0x30] sm:$0xff]
    %v24 = vld [vmem:[%s0 + $0x38] sm:$0xff]
    %v25 = vld [vmem:[%s0 + $0x40] sm:$0xff]
    %v26 = vld [vmem:[%s0 + $0x48] sm:$0xff]
    %v27 = vld [vmem:[%s0 + $0x50] sm:$0xff]
    %v28 = vld [vmem:[%s0 + $0x58] sm:$0xff]
    %v29 = vld [vmem:[%s0 + $0x60] sm:$0xff]
    %v30 = vld [vmem:[%s0 + $0x68] sm:$0xff]
    %v31 = vld [vmem:[%s0 + $0x70] sm:$0xff]
    %v32 = vld [vmem:[%s0 + $0x78] sm:$0xff]
    %vm33 = vcmask 64512
    %v35 = vsel %vm33, %v17, 0
    %v38 = vsel %vm33, %v18, 0
    %v41 = vsel %vm33, %v19, 0
    %v44 = vsel %vm33, %v20, 0
    %v47 = vsel %vm33, %v21, 0
    %v50 = vsel %vm33, %v22, 0
    %v53 = vsel %vm33, %v23, 0
    %v56 = vsel %vm33, %v24, 0
    %v59 = vsel %vm33, %v25, 0
    %v62 = vsel %vm33, %v26, 0
    %v65 = vsel %vm33, %v27, 0
    %v68 = vsel %vm33, %v28, 0
    %v71 = vsel %vm33, %v29, 0
    %v74 = vsel %vm33, %v30, 0
    %v77 = vsel %vm33, %v31, 0
    %v80 = vsel %vm33, %v32, 0
    %82 = vmatprep.subr.mxu0 0.0
    %83 = vmatpush1.msra.mxu0 0.0
    %84 = vmatprep.subr.mxu0 0.0
    %85 = vmatpush1.msra.mxu0 0.0
    %86 = vmatprep.subr.mxu0 0.0
    %87 = vmatpush1.msra.mxu0 0.0
    %88 = vmatprep.subr.mxu0 0.0
    %89 = vmatpush1.msra.mxu0 0.0
    %90 = vmatprep.subr.mxu0 0.0
    %91 = vmatpush1.msra.mxu0 0.0
    %92 = vmatprep.subr.mxu0 0.0
    %93 = vmatpush1.msra.mxu0 0.0
    %94 = vmatprep.subr.mxu0 0.0
    %95 = vmatpush1.msra.mxu0 0.0
    %96 = vmatprep.subr.mxu0 0.0
    %97 = vmatpush1.msra.mxu0 0.0
    %98 = vmatprep.subr.mxu0 0.0
    %99 = vmatpush1.msra.mxu0 0.0
    %100 = vmatprep.subr.mxu0 0.0
    %101 = vmatpush1.msra.mxu0 0.0
    %102 = vmatprep.subr.mxu0 0.0
    %103 = vmatpush1.msra.mxu0 0.0
    %104 = vmatprep.subr.mxu0 0.0
    %105 = vmatpush1.msra.mxu0 0.0
    %106 = vmatprep.subr.mxu0 0.0
    %107 = vmatpush1.msra.mxu0 0.0
    %108 = vmatprep.subr.mxu0 0.0
    %109 = vmatpush1.msra.mxu0 0.0
    %110 = vmatprep.subr.mxu0 0.0
    %111 = vmatpush1.msra.mxu0 0.0
    %112 = vmatprep.subr.mxu0 0.0
    %113 = vmatpush1.msra.mxu0 %v15
    %114 = vmatprep.subr.mxu0 0.0
    %115 = vmatpush2.msra.mxu0 0.0
    %116 = vmatprep.subr.mxu0 0.0
    %117 = vmatpush2.msra.mxu0 0.0
    %118 = vmatprep.subr.mxu0 0.0
    %119 = vmatpush2.msra.mxu0 0.0
    %120 = vmatprep.subr.mxu0 0.0
    %121 = vmatpush2.msra.mxu0 0.0
    %122 = vmatprep.subr.mxu0 0.0
    %123 = vmatpush2.msra.mxu0 0.0
    %124 = vmatprep.subr.mxu0 0.0
    %125 = vmatpush2.msra.mxu0 0.0
    %126 = vmatprep.subr.mxu0 0.0
    %127 = vmatpush2.msra.mxu0 0.0
    %128 = vmatprep.subr.mxu0 0.0
    %129 = vmatpush2.msra.mxu0 0.0
    %130 = vmatprep.subr.mxu0 0.0
    %131 = vmatpush2.msra.mxu0 0.0
    %132 = vmatprep.subr.mxu0 0.0
    %133 = vmatpush2.msra.mxu0 0.0
    %134 = vmatprep.subr.mxu0 0.0
    %135 = vmatpush2.msra.mxu0 0.0
    %136 = vmatprep.subr.mxu0 0.0
    %137 = vmatpush2.msra.mxu0 0.0
    %138 = vmatprep.subr.mxu0 0.0
    %139 = vmatpush2.msra.mxu0 0.0
    %140 = vmatprep.subr.mxu0 0.0
    %141 = vmatpush2.msra.mxu0 0.0
    %142 = vmatprep.subr.mxu0 0.0
    %143 = vmatpush2.msra.mxu0 0.0
    %144 = vmatprep.subr.mxu0 0.0
    %145 = vmatpush2.msra.mxu0 0.0
    %146 = vmatprep.mubr.f32.mxu0 0.0
    %147 = vmatmul.mubr.f32.gmra.mxu0 %v35
    %v148 = vpop.f32.mrf.mxu0
    %v149 = vadd.f32 0.0, %v148
    %v150 = vpop.f32.mrf.mxu0
    %151 = vmatprep.mubr.f32.mxu0 0.0
    %152 = vmatmul.mubr.f32.gmra.mxu0 %v38
    %v153 = vpop.f32.mrf.mxu0
    %v154 = vadd.f32 0.0, %v153
    %v155 = vpop.f32.mrf.mxu0
    %156 = vmatprep.mubr.f32.mxu0 0.0
    %157 = vmatmul.mubr.f32.gmra.mxu0 %v41
    %v158 = vpop.f32.mrf.mxu0
    %v159 = vadd.f32 0.0, %v158
    %v160 = vpop.f32.mrf.mxu0
    %161 = vmatprep.mubr.f32.mxu0 0.0
    %162 = vmatmul.mubr.f32.gmra.mxu0 %v44
    %v163 = vpop.f32.mrf.mxu0
    %v164 = vadd.f32 0.0, %v163
    %v165 = vpop.f32.mrf.mxu0
    %166 = vmatprep.mubr.f32.mxu0 0.0
    %167 = vmatmul.mubr.f32.gmra.mxu0 %v47
    %v168 = vpop.f32.mrf.mxu0
    %v169 = vadd.f32 0.0, %v168
    %v170 = vpop.f32.mrf.mxu0
    %171 = vmatprep.mubr.f32.mxu0 0.0
    %172 = vmatmul.mubr.f32.gmra.mxu0 %v50
    %v173 = vpop.f32.mrf.mxu0
    %v174 = vadd.f32 0.0, %v173
    %v175 = vpop.f32.mrf.mxu0
    %176 = vmatprep.mubr.f32.mxu0 0.0
    %177 = vmatmul.mubr.f32.gmra.mxu0 %v53
    %v178 = vpop.f32.mrf.mxu0
    %v179 = vadd.f32 0.0, %v178
    %v180 = vpop.f32.mrf.mxu0
    %181 = vmatprep.mubr.f32.mxu0 0.0
    %182 = vmatmul.mubr.f32.gmra.mxu0 %v56
    %v183 = vpop.f32.mrf.mxu0
    %v184 = vadd.f32 0.0, %v183
    %v185 = vpop.f32.mrf.mxu0
    %186 = vmatprep.mubr.f32.mxu0 0.0
    %187 = vmatmul.mubr.f32.gmra.mxu0 %v59
    %v188 = vpop.f32.mrf.mxu0
    %v189 = vadd.f32 0.0, %v188
    %v190 = vpop.f32.mrf.mxu0
    %191 = vmatprep.mubr.f32.mxu0 0.0
    %192 = vmatmul.mubr.f32.gmra.mxu0 %v62
    %v193 = vpop.f32.mrf.mxu0
    %v194 = vadd.f32 0.0, %v193
    %v195 = vpop.f32.mrf.mxu0
    %196 = vmatprep.mubr.f32.mxu0 0.0
    %197 = vmatmul.mubr.f32.gmra.mxu0 %v65
    %v198 = vpop.f32.mrf.mxu0
    %v199 = vadd.f32 0.0, %v198
    %v200 = vpop.f32.mrf.mxu0
    %201 = vmatprep.mubr.f32.mxu0 0.0
    %202 = vmatmul.mubr.f32.gmra.mxu0 %v68
    %v203 = vpop.f32.mrf.mxu0
    %v204 = vadd.f32 0.0, %v203
    %v205 = vpop.f32.mrf.mxu0
    %206 = vmatprep.mubr.f32.mxu0 0.0
    %207 = vmatmul.mubr.f32.gmra.mxu0 %v71
    %v208 = vpop.f32.mrf.mxu0
    %v209 = vadd.f32 0.0, %v208
    %v210 = vpop.f32.mrf.mxu0
    %211 = vmatprep.mubr.f32.mxu0 0.0
    %212 = vmatmul.mubr.f32.gmra.mxu0 %v74
    %v213 = vpop.f32.mrf.mxu0
    %v214 = vadd.f32 0.0, %v213
    %v215 = vpop.f32.mrf.mxu0
    %216 = vmatprep.mubr.f32.mxu0 0.0
    %217 = vmatmul.mubr.f32.gmra.mxu0 %v77
    %v218 = vpop.f32.mrf.mxu0
    %v219 = vadd.f32 0.0, %v218
    %v220 = vpop.f32.mrf.mxu0
    %221 = vmatprep.mubr.f32.mxu0 0.0
    %222 = vmatmul.mubr.f32.gmra.mxu0 %v80
    %v223 = vpop.f32.mrf.mxu0
    %v224 = vadd.f32 0.0, %v223
    %v225 = vpop.f32.mrf.mxu0
    %226 = vdwg.mxu0
    %v228 = vlaneseq
    %v229 = vshrl.u32 %v228, 7
    %v230 = vsub.s32 0, %v229
    %v231 = vrot.slane %v16, %v230
    %v233 = vsub.f32 %v149, %v231
    %v234 = vsub.f32 %v154, %v231
    %v235 = vsub.f32 %v159, %v231
    %v236 = vsub.f32 %v164, %v231
    %v237 = vsub.f32 %v169, %v231
    %v238 = vsub.f32 %v174, %v231
    %v239 = vsub.f32 %v179, %v231
    %v240 = vsub.f32 %v184, %v231
    %v241 = vsub.f32 %v189, %v231
    %v242 = vsub.f32 %v194, %v231
    %v243 = vsub.f32 %v199, %v231
    %v244 = vsub.f32 %v204, %v231
    %v245 = vsub.f32 %v209, %v231
    %v246 = vsub.f32 %v214, %v231
    %v247 = vsub.f32 %v219, %v231
    %v248 = vsub.f32 %v224, %v231
    %v249 = vmul.f32 %v233, %v233
    %v250 = vmul.f32 %v234, %v234
    %v251 = vmul.f32 %v235, %v235
    %v252 = vmul.f32 %v236, %v236
    %v253 = vmul.f32 %v237, %v237
    %v254 = vmul.f32 %v238, %v238
    %v255 = vmul.f32 %v239, %v239
    %v256 = vmul.f32 %v240, %v240
    %v257 = vmul.f32 %v241, %v241
    %v258 = vmul.f32 %v242, %v242
    %v259 = vmul.f32 %v243, %v243
    %v260 = vmul.f32 %v244, %v244
    %v261 = vmul.f32 %v245, %v245
    %v262 = vmul.f32 %v246, %v246
    %v263 = vmul.f32 %v247, %v247
    %v264 = vmul.f32 %v248, %v248
    %v265 = vsub.f32 0.0, %v249
    %v266 = vsub.f32 0.0, %v250
    %v267 = vsub.f32 0.0, %v251
    %v268 = vsub.f32 0.0, %v252
    %v269 = vsub.f32 0.0, %v253
    %v270 = vsub.f32 0.0, %v254
    %v271 = vsub.f32 0.0, %v255
    %v272 = vsub.f32 0.0, %v256
    %v273 = vsub.f32 0.0, %v257
    %v274 = vsub.f32 0.0, %v258
    %v275 = vsub.f32 0.0, %v259
    %v276 = vsub.f32 0.0, %v260
    %v277 = vsub.f32 0.0, %v261
    %v278 = vsub.f32 0.0, %v262
    %v279 = vsub.f32 0.0, %v263
    %v280 = vsub.f32 0.0, %v264
    %v281 = vmul.f32 %v265, 1.442695
    %v282 = vpow.pop %v281
    %v283 = vmul.f32 %v266, 1.442695
    %v284 = vpow.pop %v283
    %v285 = vmul.f32 %v267, 1.442695
    %v286 = vpow.pop %v285
    %v287 = vmul.f32 %v268, 1.442695
    %v288 = vpow.pop %v287
    %v289 = vmul.f32 %v269, 1.442695
    %v290 = vpow.pop %v289
    %v291 = vmul.f32 %v270, 1.442695
    %v292 = vpow.pop %v291
    %v293 = vmul.f32 %v271, 1.442695
    %v294 = vpow.pop %v293
    %v295 = vmul.f32 %v272, 1.442695
    %v296 = vpow.pop %v295
    %v297 = vmul.f32 %v273, 1.442695
    %v298 = vpow.pop %v297
    %v299 = vmul.f32 %v274, 1.442695
    %v300 = vpow.pop %v299
    %v301 = vmul.f32 %v275, 1.442695
    %v302 = vpow.pop %v301
    %v303 = vmul.f32 %v276, 1.442695
    %v304 = vpow.pop %v303
    %v305 = vmul.f32 %v277, 1.442695
    %v306 = vpow.pop %v305
    %v307 = vmul.f32 %v278, 1.442695
    %v308 = vpow.pop %v307
    %v309 = vmul.f32 %v279, 1.442695
    %v310 = vpow.pop %v309
    %v311 = vmul.f32 %v280, 1.442695
    %v312 = vpow.pop %v311
    %313 = vst [vmem:[#allocation2] sm:$0xff] %v282
    %314 = vst [vmem:[#allocation2 + $0x8] sm:$0xff] %v284
    %315 = vst [vmem:[#allocation2 + $0x10] sm:$0xff] %v286
    %316 = vst [vmem:[#allocation2 + $0x18] sm:$0xff] %v288
    %317 = vst [vmem:[#allocation2 + $0x20] sm:$0xff] %v290
    %318 = vst [vmem:[#allocation2 + $0x28] sm:$0xff] %v292
    %319 = vst [vmem:[#allocation2 + $0x30] sm:$0xff] %v294
    %320 = vst [vmem:[#allocation2 + $0x38] sm:$0xff] %v296
    %321 = vst [vmem:[#allocation2 + $0x40] sm:$0xff] %v298
    %322 = vst [vmem:[#allocation2 + $0x48] sm:$0xff] %v300
    %323 = vst [vmem:[#allocation2 + $0x50] sm:$0xff] %v302
    %324 = vst [vmem:[#allocation2 + $0x58] sm:$0xff] %v304
    %325 = vst [vmem:[#allocation2 + $0x60] sm:$0xff] %v306
    %326 = vst [vmem:[#allocation2 + $0x68] sm:$0xff] %v308
    %327 = vst [vmem:[#allocation2 + $0x70] sm:$0xff] %v310
    %328 = vst [vmem:[#allocation2 + $0x78] sm:$0xff] %v312
    %s329 = scalar_lea.vmem %s0, 128
    %v330 = vld [vmem:[%s329] sm:$0xff]
    %v331 = vld [vmem:[%s329 + $0x8] sm:$0xff]
    %v332 = vld [vmem:[%s329 + $0x10] sm:$0xff]
    %v333 = vld [vmem:[%s329 + $0x18] sm:$0xff]
    %v334 = vld [vmem:[%s329 + $0x20] sm:$0xff]
    %v335 = vld [vmem:[%s329 + $0x28] sm:$0xff]
    %v336 = vld [vmem:[%s329 + $0x30] sm:$0xff]
    %v337 = vld [vmem:[%s329 + $0x38] sm:$0xff]
    %v338 = vld [vmem:[%s329 + $0x40] sm:$0xff]
    %v339 = vld [vmem:[%s329 + $0x48] sm:$0xff]
    %v340 = vld [vmem:[%s329 + $0x50] sm:$0xff]
    %v341 = vld [vmem:[%s329 + $0x58] sm:$0xff]
    %v342 = vld [vmem:[%s329 + $0x60] sm:$0xff]
    %v343 = vld [vmem:[%s329 + $0x68] sm:$0xff]
    %v344 = vld [vmem:[%s329 + $0x70] sm:$0xff]
    %v345 = vld [vmem:[%s329 + $0x78] sm:$0xff]
    %v347 = vsel %vm33, %v330, 0
    %v350 = vsel %vm33, %v331, 0
    %v353 = vsel %vm33, %v332, 0
    %v356 = vsel %vm33, %v333, 0
    %v359 = vsel %vm33, %v334, 0
    %v362 = vsel %vm33, %v335, 0
    %v365 = vsel %vm33, %v336, 0
    %v368 = vsel %vm33, %v337, 0
    %v371 = vsel %vm33, %v338, 0
    %v374 = vsel %vm33, %v339, 0
    %v377 = vsel %vm33, %v340, 0
    %v380 = vsel %vm33, %v341, 0
    %v383 = vsel %vm33, %v342, 0
    %v386 = vsel %vm33, %v343, 0
    %v389 = vsel %vm33, %v344, 0
    %v392 = vsel %vm33, %v345, 0
    %394 = vmatprep.subr.mxu0 0.0
    %395 = vmatpush1.msra.mxu0 0.0
    %396 = vmatprep.subr.mxu0 0.0
    %397 = vmatpush1.msra.mxu0 0.0
    %398 = vmatprep.subr.mxu0 0.0
    %399 = vmatpush1.msra.mxu0 0.0
    %400 = vmatprep.subr.mxu0 0.0
    %401 = vmatpush1.msra.mxu0 0.0
    %402 = vmatprep.subr.mxu0 0.0
    %403 = vmatpush1.msra.mxu0 0.0
    %404 = vmatprep.subr.mxu0 0.0
    %405 = vmatpush1.msra.mxu0 0.0
    %406 = vmatprep.subr.mxu0 0.0
    %407 = vmatpush1.msra.mxu0 0.0
    %408 = vmatprep.subr.mxu0 0.0
    %409 = vmatpush1.msra.mxu0 0.0
    %410 = vmatprep.subr.mxu0 0.0
    %411 = vmatpush1.msra.mxu0 0.0
    %412 = vmatprep.subr.mxu0 0.0
    %413 = vmatpush1.msra.mxu0 0.0
    %414 = vmatprep.subr.mxu0 0.0
    %415 = vmatpush1.msra.mxu0 0.0
    %416 = vmatprep.subr.mxu0 0.0
    %417 = vmatpush1.msra.mxu0 0.0
    %418 = vmatprep.subr.mxu0 0.0
    %419 = vmatpush1.msra.mxu0 0.0
    %420 = vmatprep.subr.mxu0 0.0
    %421 = vmatpush1.msra.mxu0 0.0
    %422 = vmatprep.subr.mxu0 0.0
    %423 = vmatpush1.msra.mxu0 0.0
    %424 = vmatprep.subr.mxu0 0.0
    %425 = vmatpush1.msra.mxu0 %v15
    %426 = vmatprep.subr.mxu0 0.0
    %427 = vmatpush2.msra.mxu0 0.0
    %428 = vmatprep.subr.mxu0 0.0
    %429 = vmatpush2.msra.mxu0 0.0
    %430 = vmatprep.subr.mxu0 0.0
    %431 = vmatpush2.msra.mxu0 0.0
    %432 = vmatprep.subr.mxu0 0.0
    %433 = vmatpush2.msra.mxu0 0.0
    %434 = vmatprep.subr.mxu0 0.0
    %435 = vmatpush2.msra.mxu0 0.0
    %436 = vmatprep.subr.mxu0 0.0
    %437 = vmatpush2.msra.mxu0 0.0
    %438 = vmatprep.subr.mxu0 0.0
    %439 = vmatpush2.msra.mxu0 0.0
    %440 = vmatprep.subr.mxu0 0.0
    %441 = vmatpush2.msra.mxu0 0.0
    %442 = vmatprep.subr.mxu0 0.0
    %443 = vmatpush2.msra.mxu0 0.0
    %444 = vmatprep.subr.mxu0 0.0
    %445 = vmatpush2.msra.mxu0 0.0
    %446 = vmatprep.subr.mxu0 0.0
    %447 = vmatpush2.msra.mxu0 0.0
    %448 = vmatprep.subr.mxu0 0.0
    %449 = vmatpush2.msra.mxu0 0.0
    %450 = vmatprep.subr.mxu0 0.0
    %451 = vmatpush2.msra.mxu0 0.0
    %452 = vmatprep.subr.mxu0 0.0
    %453 = vmatpush2.msra.mxu0 0.0
    %454 = vmatprep.subr.mxu0 0.0
    %455 = vmatpush2.msra.mxu0 0.0
    %456 = vmatprep.subr.mxu0 0.0
    %457 = vmatpush2.msra.mxu0 0.0
    %458 = vmatprep.mubr.f32.mxu0 0.0
    %459 = vmatmul.mubr.f32.gmra.mxu0 %v347
    %v460 = vpop.f32.mrf.mxu0
    %v461 = vadd.f32 0.0, %v460
    %v462 = vpop.f32.mrf.mxu0
    %463 = vmatprep.mubr.f32.mxu0 0.0
    %464 = vmatmul.mubr.f32.gmra.mxu0 %v350
    %v465 = vpop.f32.mrf.mxu0
    %v466 = vadd.f32 0.0, %v465
    %v467 = vpop.f32.mrf.mxu0
    %468 = vmatprep.mubr.f32.mxu0 0.0
    %469 = vmatmul.mubr.f32.gmra.mxu0 %v353
    %v470 = vpop.f32.mrf.mxu0
    %v471 = vadd.f32 0.0, %v470
    %v472 = vpop.f32.mrf.mxu0
    %473 = vmatprep.mubr.f32.mxu0 0.0
    %474 = vmatmul.mubr.f32.gmra.mxu0 %v356
    %v475 = vpop.f32.mrf.mxu0
    %v476 = vadd.f32 0.0, %v475
    %v477 = vpop.f32.mrf.mxu0
    %478 = vmatprep.mubr.f32.mxu0 0.0
    %479 = vmatmul.mubr.f32.gmra.mxu0 %v359
    %v480 = vpop.f32.mrf.mxu0
    %v481 = vadd.f32 0.0, %v480
    %v482 = vpop.f32.mrf.mxu0
    %483 = vmatprep.mubr.f32.mxu0 0.0
    %484 = vmatmul.mubr.f32.gmra.mxu0 %v362
    %v485 = vpop.f32.mrf.mxu0
    %v486 = vadd.f32 0.0, %v485
    %v487 = vpop.f32.mrf.mxu0
    %488 = vmatprep.mubr.f32.mxu0 0.0
    %489 = vmatmul.mubr.f32.gmra.mxu0 %v365
    %v490 = vpop.f32.mrf.mxu0
    %v491 = vadd.f32 0.0, %v490
    %v492 = vpop.f32.mrf.mxu0
    %493 = vmatprep.mubr.f32.mxu0 0.0
    %494 = vmatmul.mubr.f32.gmra.mxu0 %v368
    %v495 = vpop.f32.mrf.mxu0
    %v496 = vadd.f32 0.0, %v495
    %v497 = vpop.f32.mrf.mxu0
    %498 = vmatprep.mubr.f32.mxu0 0.0
    %499 = vmatmul.mubr.f32.gmra.mxu0 %v371
    %v500 = vpop.f32.mrf.mxu0
    %v501 = vadd.f32 0.0, %v500
    %v502 = vpop.f32.mrf.mxu0
    %503 = vmatprep.mubr.f32.mxu0 0.0
    %504 = vmatmul.mubr.f32.gmra.mxu0 %v374
    %v505 = vpop.f32.mrf.mxu0
    %v506 = vadd.f32 0.0, %v505
    %v507 = vpop.f32.mrf.mxu0
    %508 = vmatprep.mubr.f32.mxu0 0.0
    %509 = vmatmul.mubr.f32.gmra.mxu0 %v377
    %v510 = vpop.f32.mrf.mxu0
    %v511 = vadd.f32 0.0, %v510
    %v512 = vpop.f32.mrf.mxu0
    %513 = vmatprep.mubr.f32.mxu0 0.0
    %514 = vmatmul.mubr.f32.gmra.mxu0 %v380
    %v515 = vpop.f32.mrf.mxu0
    %v516 = vadd.f32 0.0, %v515
    %v517 = vpop.f32.mrf.mxu0
    %518 = vmatprep.mubr.f32.mxu0 0.0
    %519 = vmatmul.mubr.f32.gmra.mxu0 %v383
    %v520 = vpop.f32.mrf.mxu0
    %v521 = vadd.f32 0.0, %v520
    %v522 = vpop.f32.mrf.mxu0
    %523 = vmatprep.mubr.f32.mxu0 0.0
    %524 = vmatmul.mubr.f32.gmra.mxu0 %v386
    %v525 = vpop.f32.mrf.mxu0
    %v526 = vadd.f32 0.0, %v525
    %v527 = vpop.f32.mrf.mxu0
    %528 = vmatprep.mubr.f32.mxu0 0.0
    %529 = vmatmul.mubr.f32.gmra.mxu0 %v389
    %v530 = vpop.f32.mrf.mxu0
    %v531 = vadd.f32 0.0, %v530
    %v532 = vpop.f32.mrf.mxu0
    %533 = vmatprep.mubr.f32.mxu0 0.0
    %534 = vmatmul.mubr.f32.gmra.mxu0 %v392
    %v535 = vpop.f32.mrf.mxu0
    %v536 = vadd.f32 0.0, %v535
    %v537 = vpop.f32.mrf.mxu0
    %538 = vdwg.mxu0
    %v539 = vsub.f32 %v461, %v231
    %v540 = vsub.f32 %v466, %v231
    %v541 = vsub.f32 %v471, %v231
    %v542 = vsub.f32 %v476, %v231
    %v543 = vsub.f32 %v481, %v231
    %v544 = vsub.f32 %v486, %v231
    %v545 = vsub.f32 %v491, %v231
    %v546 = vsub.f32 %v496, %v231
    %v547 = vsub.f32 %v501, %v231
    %v548 = vsub.f32 %v506, %v231
    %v549 = vsub.f32 %v511, %v231
    %v550 = vsub.f32 %v516, %v231
    %v551 = vsub.f32 %v521, %v231
    %v552 = vsub.f32 %v526, %v231
    %v553 = vsub.f32 %v531, %v231
    %v554 = vsub.f32 %v536, %v231
    %v555 = vmul.f32 %v539, %v539
    %v556 = vmul.f32 %v540, %v540
    %v557 = vmul.f32 %v541, %v541
    %v558 = vmul.f32 %v542, %v542
    %v559 = vmul.f32 %v543, %v543
    %v560 = vmul.f32 %v544, %v544
    %v561 = vmul.f32 %v545, %v545
    %v562 = vmul.f32 %v546, %v546
    %v563 = vmul.f32 %v547, %v547
    %v564 = vmul.f32 %v548, %v548
    %v565 = vmul.f32 %v549, %v549
    %v566 = vmul.f32 %v550, %v550
    %v567 = vmul.f32 %v551, %v551
    %v568 = vmul.f32 %v552, %v552
    %v569 = vmul.f32 %v553, %v553
    %v570 = vmul.f32 %v554, %v554
    %v571 = vsub.f32 0.0, %v555
    %v572 = vsub.f32 0.0, %v556
    %v573 = vsub.f32 0.0, %v557
    %v574 = vsub.f32 0.0, %v558
    %v575 = vsub.f32 0.0, %v559
    %v576 = vsub.f32 0.0, %v560
    %v577 = vsub.f32 0.0, %v561
    %v578 = vsub.f32 0.0, %v562
    %v579 = vsub.f32 0.0, %v563
    %v580 = vsub.f32 0.0, %v564
    %v581 = vsub.f32 0.0, %v565
    %v582 = vsub.f32 0.0, %v566
    %v583 = vsub.f32 0.0, %v567
    %v584 = vsub.f32 0.0, %v568
    %v585 = vsub.f32 0.0, %v569
    %v586 = vsub.f32 0.0, %v570
    %v587 = vmul.f32 %v571, 1.442695
    %v588 = vpow.pop %v587
    %v589 = vmul.f32 %v572, 1.442695
    %v590 = vpow.pop %v589
    %v591 = vmul.f32 %v573, 1.442695
    %v592 = vpow.pop %v591
    %v593 = vmul.f32 %v574, 1.442695
    %v594 = vpow.pop %v593
    %v595 = vmul.f32 %v575, 1.442695
    %v596 = vpow.pop %v595
    %v597 = vmul.f32 %v576, 1.442695
    %v598 = vpow.pop %v597
    %v599 = vmul.f32 %v577, 1.442695
    %v600 = vpow.pop %v599
    %v601 = vmul.f32 %v578, 1.442695
    %v602 = vpow.pop %v601
    %v603 = vmul.f32 %v579, 1.442695
    %v604 = vpow.pop %v603
    %v605 = vmul.f32 %v580, 1.442695
    %v606 = vpow.pop %v605
    %v607 = vmul.f32 %v581, 1.442695
    %v608 = vpow.pop %v607
    %v609 = vmul.f32 %v582, 1.442695
    %v610 = vpow.pop %v609
    %v611 = vmul.f32 %v583, 1.442695
    %v612 = vpow.pop %v611
    %v613 = vmul.f32 %v584, 1.442695
    %v614 = vpow.pop %v613
    %v615 = vmul.f32 %v585, 1.442695
    %v616 = vpow.pop %v615
    %v617 = vmul.f32 %v586, 1.442695
    %v618 = vpow.pop %v617
    %s619 = scalar_lea.vmem [#allocation2], 128
    %620 = vst [vmem:[%s619] sm:$0xff] %v588
    %621 = vst [vmem:[%s619 + $0x8] sm:$0xff] %v590
    %622 = vst [vmem:[%s619 + $0x10] sm:$0xff] %v592
    %623 = vst [vmem:[%s619 + $0x18] sm:$0xff] %v594
    %624 = vst [vmem:[%s619 + $0x20] sm:$0xff] %v596
    %625 = vst [vmem:[%s619 + $0x28] sm:$0xff] %v598
    %626 = vst [vmem:[%s619 + $0x30] sm:$0xff] %v600
    %627 = vst [vmem:[%s619 + $0x38] sm:$0xff] %v602
    %628 = vst [vmem:[%s619 + $0x40] sm:$0xff] %v604
    %629 = vst [vmem:[%s619 + $0x48] sm:$0xff] %v606
    %630 = vst [vmem:[%s619 + $0x50] sm:$0xff] %v608
    %631 = vst [vmem:[%s619 + $0x58] sm:$0xff] %v610
    %632 = vst [vmem:[%s619 + $0x60] sm:$0xff] %v612
    %633 = vst [vmem:[%s619 + $0x68] sm:$0xff] %v614
    %634 = vst [vmem:[%s619 + $0x70] sm:$0xff] %v616
    %635 = vst [vmem:[%s619 + $0x78] sm:$0xff] %v618
    // Predicated region
    $region14: #{tpu_custom_call.1} parent=1 // pred_check
      _
    $region15: #{tpu_custom_call.1} parent=1 // pred_check_branch
      %637 = sbr.rel (0) target = $region17
    $region16: #{tpu_custom_call.1} parent=1 // pred_region
      %s639 = ssub.s32 4096, 4096
      %640 = vsyncadd [#allocation3], %s639
      %s641 = sshll.u32 [#allocation2], 4
      %s642 = int_to_ptr.vmem [resolvable:$true] %s641
      %647 = dma.vmem_to_hbm [thread:$0]  %s642, 4096, %s3, [#allocation3], 128, 128, 8
    $region17: #{tpu_custom_call.1} parent=1 // pred_fallthru
      _
    // Predicated region
    $region18: #{tpu_custom_call.1} parent=1 // pred_check
      _
    $region19: #{tpu_custom_call.1} parent=1 // pred_check_branch
      %649 = sbr.rel (0) target = $region21
    $region20: #{tpu_custom_call.1} parent=1 // pred_region
      %650 = dma.done [#allocation3], 4096
    $region21: #{tpu_custom_call.1} parent=1 // pred_fallthru
      _
    %651 = vsyncpa [#allocation3], 1

</llo_original>
